<compile_context>
chip_gen: v6e
topology: v6e:2x2x1
jax: 0.10.0
libtpu: 0.0.40
codegen_flags: <defaults>
</compile_context>

<pallas_src>
import functools

import jax
import jax.numpy as jnp
from jax import lax
from jax.experimental import pallas as pl
from jax.experimental.pallas import tpu as pltpu


def _round_up(x, m):
    return (x + m - 1) // m * m


def _vmem_capacity_bytes():
    """Physical per-core VMEM (128 MiB v5e/v6e, 64 MiB v7x); conservative fallback."""
    try:
        cap = int(pltpu.get_tpu_info().vmem_capacity_bytes)
        if cap > 0:
            return cap
    except Exception:
        pass
    return 64 << 20


def _vmem_estimate(tm, tk, d_pad, itm, wtm):
    """Per-step VMEM working set (double-buffered streams + scratch + live hidden)."""
    x_tiles = 2 * tm * d_pad * itm            # x rows, double-buffered
    out_tiles = 2 * tm * d_pad * itm          # output rows, double-buffered
    acc = tm * d_pad * 4                      # f32 accumulator scratch
    w_blocks = 2 * 2 * d_pad * tk * wtm       # w1 + w2 chunks, double-buffered
    vecs = 2 * (tk + 3 * d_pad) * 4           # b1 chunk, b2, gamma, beta
    hidden = tm * tk * (4 + wtm)              # live f32 h + its MXU-dtype cast
    return x_tiles + out_tiles + acc + w_blocks + vecs + hidden


def _ffn_kernel(x_ref, w1_ref, b1_ref, w2_ref, b2_ref, gamma_ref, beta_ref,
                o_ref, acc_ref, *, norm_eps, d_model, d_pad):
    k = pl.program_id(1)
    nk = pl.num_programs(1)

    @pl.when(k == 0)
    def _():
        acc_ref[...] = jnp.zeros_like(acc_ref)

    x = x_ref[...]                                           # (tm, d_pad)

    # fc1 chunk on the MXU (operands in the weight dtype, f32 accumulation).
    h = jnp.dot(x.astype(w1_ref.dtype), w1_ref[...],
                preferred_element_type=jnp.float32) + b1_ref[...]     # (tm, tk)
    # Hardswish: x * relu6(x + 3) / 6  (f32, VPU).  Elementwise, so valid per chunk.
    h = h * jnp.clip(h + 3.0, 0.0, 6.0) * (1.0 / 6.0)
    # dropout (eval) -> identity

    # fc2 partial product for this inner chunk, accumulated into f32 VMEM scratch.
    acc_ref[...] += jnp.dot(h.astype(w2_ref.dtype), w2_ref[...],
                            preferred_element_type=jnp.float32)

    @pl.when(k == nk - 1)
    def _():
        # dropout (eval) -> identity; bias, residual, LayerNorm epilogue in f32.
        z = acc_ref[...] + b2_ref[...] + x.astype(jnp.float32)        # (tm, d_pad)
        if d_pad != d_model:
            # LayerNorm over the *real* d_model columns (lane axis is zero-padded).
            lane = lax.broadcasted_iota(jnp.int32, (1, d_pad), 1)
            mask = (lane < d_model).astype(jnp.float32)
            mean = jnp.sum(z * mask, axis=-1, keepdims=True) * (1.0 / d_model)
            centered = (z - mean) * mask
            var = jnp.sum(centered * centered, axis=-1, keepdims=True) * (1.0 / d_model)
        else:
            mean = jnp.mean(z, axis=-1, keepdims=True)
            centered = z - mean
            var = jnp.mean(centered * centered, axis=-1, keepdims=True)
        z_norm = centered * lax.rsqrt(var + norm_eps)
        o_ref[...] = (z_norm * gamma_ref[...] + beta_ref[...]).astype(o_ref.dtype)


def make_feed_forward(w1, b1, w2, b2, gamma, beta, *, norm_eps=1e-12,
                      tm=None, tk=None, mxu_dtype=None):
    """Pads/casts parameters ONCE and returns `apply(x)` calling the fused kernel.

    w1: (d_model, inner), w2: (inner, d_model) so y = x @ W + b.
    mxu_dtype: optional dtype for MXU operands (e.g. jnp.bfloat16); accumulation and
    the Hardswish/residual/LayerNorm epilogue stay in f32.
    """
    d_model, inner = w1.shape
    assert w2.shape == (inner, d_model)

    w_dtype = jnp.dtype(mxu_dtype) if mxu_dtype is not None else jnp.dtype(w1.dtype)
    wtm = w_dtype.itemsize

    cap = _vmem_capacity_bytes()
    budget = max(cap - (16 << 20), 32 << 20)

    d_pad = _round_up(d_model, 128)

    # Row tile default: 512 on 128-MiB parts (v5e/v6e), 256 on 64-MiB parts (v7x).
    tm_req = tm if tm is not None else (512 if cap >= (96 << 20) else 256)

    # Inner (fc1-output) tile = grid K axis.  Multiples of 256 feed the 256-wide MXU
    # on v6e/v7x without partial passes; shrink until the working set fits VMEM.
    if tk is None:
        tk = min(512, _round_up(inner, 128))
        while tk > 128 and _vmem_estimate(tm_req, tk, d_pad, 4, wtm) > budget:
            tk //= 2
    tk = max(128, _round_up(tk, 128))
    tk = min(tk, _round_up(inner, 128))
    inner_pad = _round_up(inner, tk)
    nk = inner_pad // tk

    # Pad/cast parameters once (hoisted out of the per-call path); skip the copy
    # entirely when already aligned.
    def _pad2(a, shape, dtype):
        a = a.astype(dtype)
        if a.shape == shape:
            return a
        return jnp.pad(a, [(0, s - d) for s, d in zip(shape, a.shape)])

    w1_p = _pad2(w1, (d_pad, inner_pad), w_dtype)
    w2_p = _pad2(w2, (inner_pad, d_pad), w_dtype)
    b1_p = _pad2(b1.reshape(1, inner), (1, inner_pad), jnp.float32)
    b2_p = _pad2(b2.reshape(1, d_model), (1, d_pad), jnp.float32)
    g_p = _pad2(gamma.reshape(1, d_model), (1, d_pad), jnp.float32)
    bt_p = _pad2(beta.reshape(1, d_model), (1, d_pad), jnp.float32)

    def apply(x):
        batch, seq, dm = x.shape
        assert dm == d_model, "d_model mismatch"
        n = batch * seq
        itm = jnp.dtype(x.dtype).itemsize

        # Row (sublane) tile: multiple of 8 for 4-byte dtypes, 16 for 2-byte.
        sub = 8 if itm >= 4 else 16
        tm_eff = max(sub, min(_round_up(tm_req, sub), _round_up(n, sub)))
        while tm_eff > sub and _vmem_estimate(tm_eff, tk, d_pad, itm, wtm) > budget:
            tm_eff = max(sub, _round_up(tm_eff // 2, sub))
        n_pad = _round_up(n, tm_eff)

        xf = x.reshape(n, d_model)
        if (n_pad, d_pad) != (n, d_model):        # skip copy when already aligned
            xf = jnp.pad(xf, ((0, n_pad - n), (0, d_pad - d_model)))

        kernel = functools.partial(_ffn_kernel, norm_eps=norm_eps,
                                   d_model=d_model, d_pad=d_pad)

        # Device-aware VMEM limit: never request more than physical capacity.
        est = _vmem_estimate(tm_eff, tk, d_pad, itm, wtm)
        vmem_bytes = int(min(max(est + (4 << 20), 16 << 20), cap - (4 << 20)))

        # Honest (un-padded) cost estimate: two matmuls, x read + out write + params,
        # one rsqrt per row for the LayerNorm.
        flops = 4 * n * d_model * inner
        bytes_accessed = (2 * n * d_model * itm
                          + 2 * d_model * inner * wtm
                          + (inner + 3 * d_model) * 4)
        cost = pl.CostEstimate(flops=flops, transcendentals=n,
                               bytes_accessed=bytes_accessed)

        out = pl.pallas_call(
            kernel,
            out_shape=jax.ShapeDtypeStruct((n_pad, d_pad), x.dtype),
            grid_spec=pltpu.PrefetchScalarGridSpec(
                num_scalar_prefetch=0,
                grid=(n_pad // tm_eff, nk),
                in_specs=[
                    pl.BlockSpec((tm_eff, d_pad), lambda i, k: (i, 0)),   # x rows
                    pl.BlockSpec((d_pad, tk), lambda i, k: (0, k)),       # w1 chunk
                    pl.BlockSpec((1, tk), lambda i, k: (0, k)),           # b1 chunk
                    pl.BlockSpec((tk, d_pad), lambda i, k: (k, 0)),       # w2 chunk
                    pl.BlockSpec((1, d_pad), lambda i, k: (0, 0)),        # b2
                    pl.BlockSpec((1, d_pad), lambda i, k: (0, 0)),        # gamma
                    pl.BlockSpec((1, d_pad), lambda i, k: (0, 0)),        # beta
                ],
                out_specs=pl.BlockSpec((tm_eff, d_pad), lambda i, k: (i, 0)),
                scratch_shapes=[pltpu.VMEM((tm_eff, d_pad), jnp.float32)],
            ),
            compiler_params=pltpu.CompilerParams(
                dimension_semantics=("parallel", "arbitrary"),
                vmem_limit_bytes=vmem_bytes),
            cost_estimate=cost,
        )(xf, w1_p, b1_p, w2_p, b2_p, g_p, bt_p)

        return out[:n, :d_model].reshape(batch, seq, d_model)

    return apply


def feed_forward(x, w1, b1, w2, b2, gamma, beta, *, norm_eps=1e-12,
                 tm=None, tk=None, mxu_dtype=None):
    """One-shot convenience wrapper (prefer make_feed_forward to hoist param prep)."""
    return make_feed_forward(w1, b1, w2, b2, gamma, beta, norm_eps=norm_eps,
                             tm=tm, tk=tk, mxu_dtype=mxu_dtype)(x)


def init_params(key, d_model, inner_size, dtype=jnp.float32):
    """Deterministic init mirroring nn.Linear default (uniform +/- 1/sqrt(fan_in))."""
    k1, k2, k3, k4 = jax.random.split(key, 4)
    bound1 = 1.0 / (d_model ** 0.5)
    bound2 = 1.0 / (inner_size ** 0.5)
    # Stored as (in_features, out_features) -> y = x @ W + b
    w1 = jax.random.uniform(k1, (d_model, inner_size), dtype, -bound1, bound1)
    b1 = jax.random.uniform(k2, (inner_size,), dtype, -bound1, bound1)
    w2 = jax.random.uniform(k3, (inner_size, d_model), dtype, -bound2, bound2)
    b2 = jax.random.uniform(k4, (d_model,), dtype, -bound2, bound2)
    gamma = jnp.ones((d_model,), dtype)
    beta = jnp.zeros((d_model,), dtype)
    return w1, b1, w2, b2, gamma, beta


def _reference(x, w1, b1, w2, b2, gamma, beta, norm_eps):
    h = x @ w1 + b1
    h = h * jnp.clip(h + 3.0, 0.0, 6.0) / 6.0
    y = h @ w2 + b2
    z = y + x
    mean = jnp.mean(z, axis=-1, keepdims=True)
    var = jnp.mean((z - mean) ** 2, axis=-1, keepdims=True)
    return (z - mean) * jax.lax.rsqrt(var + norm_eps) * gamma + beta


if __name__ == "__main__":
    batch, seq, d_model, inner_size = 2, 8, 32, 64
    norm_eps = 1e-12

    key = jax.random.PRNGKey(0)
    kx, kp = jax.random.split(key)
    x = jax.random.normal(kx, (batch, seq, d_model), jnp.float32)
    w1, b1, w2, b2, gamma, beta = init_params(kp, d_model, inner_size)

    ref = _reference(x, w1, b1, w2, b2, gamma, beta, norm_eps)

    # 1) Strict f32 path: exact-ish check against the plain-JAX reference.
    ffn_f32 = make_feed_forward(w1, b1, w2, b2, gamma, beta, norm_eps=norm_eps)
    out = jax.block_until_ready(ffn_f32(x))
    assert out.shape == x.shape, "shape mismatch"
    assert bool(jnp.allclose(out, ref, atol=1e-5, rtol=1e-5)), "f32 mismatch vs reference"

    # 2) bf16 activations with bf16 MXU weights (native path): tolerance test.
    ffn_bf16 = make_feed_forward(w1, b1, w2, b2, gamma, beta, norm_eps=norm_eps,
                                 mxu_dtype=jnp.bfloat16)
    out_bf16 = jax.block_until_ready(ffn_bf16(x.astype(jnp.bfloat16)))
    assert out_bf16.dtype == jnp.bfloat16
    assert bool(jnp.allclose(out_bf16.astype(jnp.float32), ref, atol=1e-1, rtol=1e-1)), \
        "bf16 path outside tolerance"

    # 3) f32 activations with bf16 MXU operands (perf flag): loose tolerance.
    out_mix = jax.block_until_ready(ffn_bf16(x))
    assert out_mix.dtype == jnp.float32
    assert bool(jnp.allclose(out_mix, ref, atol=1e-1, rtol=1e-1)), \
        "bf16-MXU/f32 path outside tolerance"

    print("KERNEL_OK")
</pallas_src>

<mosaic_0001>
module attributes {stable_mosaic.version = 11 : i64} {
  func.func @_ffn_kernel(%arg0: i32, %arg1: i32, %arg2: memref<16x128xf32, #tpu.memory_space<vmem>>, %arg3: memref<128x128xf32, #tpu.memory_space<vmem>>, %arg4: memref<1x128xf32, #tpu.memory_space<vmem>>, %arg5: memref<128x128xf32, #tpu.memory_space<vmem>>, %arg6: memref<1x128xf32, #tpu.memory_space<vmem>>, %arg7: memref<1x128xf32, #tpu.memory_space<vmem>>, %arg8: memref<1x128xf32, #tpu.memory_space<vmem>>, %arg9: memref<16x128xf32, #tpu.memory_space<vmem>>, %arg10: memref<16x128xf32, #tpu.memory_space<vmem>>) attributes {dimension_semantics = [#tpu.dimension_semantics<parallel>, #tpu.dimension_semantics<arbitrary>], iteration_bounds = array<i64: 1, 1>, scalar_prefetch = 0 : i64, scratch_operands = 1 : i64, tpu.core_type = #tpu.core_type<tc>, window_params = [{transform_indices = @transform_0, window_bounds = array<i64: 16, 128>}, {transform_indices = @transform_1, window_bounds = array<i64: 128, 128>}, {transform_indices = @transform_2, window_bounds = array<i64: 1, 128>}, {transform_indices = @transform_3, window_bounds = array<i64: 128, 128>}, {pipeline_mode = #tpu.pipeline_mode<synchronous>, transform_indices = @transform_4, window_bounds = array<i64: 1, 128>}, {pipeline_mode = #tpu.pipeline_mode<synchronous>, transform_indices = @transform_5, window_bounds = array<i64: 1, 128>}, {pipeline_mode = #tpu.pipeline_mode<synchronous>, transform_indices = @transform_6, window_bounds = array<i64: 1, 128>}, {transform_indices = @transform_7, window_bounds = array<i64: 16, 128>}]} {
    %c0_i32 = arith.constant 0 : i32
    %0 = arith.cmpi eq, %arg1, %c0_i32 : i32
    %1 = arith.extui %0 : i1 to i32
    %c0_i32_0 = arith.constant 0 : i32
    %2 = arith.cmpi ne, %1, %c0_i32_0 : i32
    scf.if %2 {
      %cst_19 = arith.constant 0.000000e+00 : f32
      %26 = vector.broadcast %cst_19 : f32 to vector<16x128xf32>
      %c0_20 = arith.constant 0 : index
      %c0_21 = arith.constant 0 : index
      %27 = vector.load %arg10[%c0_20, %c0_21] : memref<16x128xf32, #tpu.memory_space<vmem>>, vector<16x128xf32>
      tpu.vector_store %arg10[%c0_20, %c0_21], %26 {strides = array<i32>} : memref<16x128xf32, #tpu.memory_space<vmem>>, vector<16x128xf32>,
    } else {
    }
    %c0 = arith.constant 0 : index
    %c0_1 = arith.constant 0 : index
    %3 = vector.load %arg2[%c0, %c0_1] : memref<16x128xf32, #tpu.memory_space<vmem>>, vector<16x128xf32>
    %c0_2 = arith.constant 0 : index
    %c0_3 = arith.constant 0 : index
    %4 = vector.load %arg3[%c0_2, %c0_3] : memref<128x128xf32, #tpu.memory_space<vmem>>, vector<128x128xf32>
    %cst = arith.constant dense<0.000000e+00> : vector<16x128xf32>
    %5 = tpu.matmul %3, %4, %cst {dimension_numbers = #tpu.dot_dimension_numbers<[1], [0], [0], [1], [0, 0, 1, 1], [], []>} : vector<16x128xf32>, vector<128x128xf32>, vector<16x128xf32> -> vector<16x128xf32>
    %c0_4 = arith.constant 0 : index
    %c0_5 = arith.constant 0 : index
    %6 = vector.load %arg4[%c0_4, %c0_5] : memref<1x128xf32, #tpu.memory_space<vmem>>, vector<1x128xf32>
    %7 = vector.broadcast %6 : vector<1x128xf32> to vector<16x128xf32>
    %8 = arith.addf %5, %7 : vector<16x128xf32>
    %cst_6 = arith.constant 3.000000e+00 : f32
    %9 = vector.broadcast %cst_6 : f32 to vector<16x128xf32>
    %10 = arith.addf %8, %9 : vector<16x128xf32>
    %cst_7 = arith.constant 0.000000e+00 : f32
    %cst_8 = arith.constant 6.000000e+00 : f32
    %11 = vector.broadcast %cst_7 : f32 to vector<16x128xf32>
    %12 = arith.maximumf %11, %10 : vector<16x128xf32>
    %13 = vector.broadcast %cst_8 : f32 to vector<16x128xf32>
    %14 = arith.minimumf %13, %12 : vector<16x128xf32>
    %15 = arith.mulf %8, %14 : vector<16x128xf32>
    %cst_9 = arith.constant 0.166666672 : f32
    %16 = vector.broadcast %cst_9 : f32 to vector<16x128xf32>
    %17 = arith.mulf %15, %16 : vector<16x128xf32>
    %c0_10 = arith.constant 0 : index
    %c0_11 = arith.constant 0 : index
    %18 = vector.load %arg10[%c0_10, %c0_11] : memref<16x128xf32, #tpu.memory_space<vmem>>, vector<16x128xf32>
    %c0_12 = arith.constant 0 : index
    %c0_13 = arith.constant 0 : index
    %19 = vector.load %arg5[%c0_12, %c0_13] : memref<128x128xf32, #tpu.memory_space<vmem>>, vector<128x128xf32>
    %cst_14 = arith.constant dense<0.000000e+00> : vector<16x128xf32>
    %20 = tpu.matmul %17, %19, %cst_14 {dimension_numbers = #tpu.dot_dimension_numbers<[1], [0], [0], [1], [0, 0, 1, 1], [], []>} : vector<16x128xf32>, vector<128x128xf32>, vector<16x128xf32> -> vector<16x128xf32>
    %21 = arith.addf %18, %20 : vector<16x128xf32>
    %c0_15 = arith.constant 0 : index
    %c0_16 = arith.constant 0 : index
    %22 = vector.load %arg10[%c0_15, %c0_16] : memref<16x128xf32, #tpu.memory_space<vmem>>, vector<16x128xf32>
    tpu.vector_store %arg10[%c0_15, %c0_16], %21 {strides = array<i32>} : memref<16x128xf32, #tpu.memory_space<vmem>>, vector<16x128xf32>,
    %c0_i32_17 = arith.constant 0 : i32
    %23 = arith.cmpi eq, %arg1, %c0_i32_17 : i32
    %24 = arith.extui %23 : i1 to i32
    %c0_i32_18 = arith.constant 0 : i32
    %25 = arith.cmpi ne, %24, %c0_i32_18 : i32
    scf.if %25 {
      %c0_19 = arith.constant 0 : index
      %c0_20 = arith.constant 0 : index
      %26 = vector.load %arg10[%c0_19, %c0_20] : memref<16x128xf32, #tpu.memory_space<vmem>>, vector<16x128xf32>
      %c0_21 = arith.constant 0 : index
      %c0_22 = arith.constant 0 : index
      %27 = vector.load %arg6[%c0_21, %c0_22] : memref<1x128xf32, #tpu.memory_space<vmem>>, vector<1x128xf32>
      %28 = vector.broadcast %27 : vector<1x128xf32> to vector<16x128xf32>
      %29 = arith.addf %26, %28 : vector<16x128xf32>
      %30 = arith.addf %29, %3 : vector<16x128xf32>
      %31 = tpu.iota {dimensions = array<i32: 1>} : vector<1x128xi32>
      %c32_i32 = arith.constant 32 : i32
      %32 = vector.broadcast %c32_i32 : i32 to vector<1x128xi32>
      %33 = arith.cmpi slt, %31, %32 : vector<1x128xi32>
      %34 = arith.extui %33 : vector<1x128xi1> to vector<1x128xi32>
      %35 = arith.sitofp %34 : vector<1x128xi32> to vector<1x128xf32>
      %36 = vector.broadcast %35 : vector<1x128xf32> to vector<16x128xf32>
      %37 = arith.mulf %30, %36 : vector<16x128xf32>
      %cst_23 = arith.constant dense<0.000000e+00> : vector<16xf32>
      %38 = vector.multi_reduction <add>, %37, %cst_23 [1] : vector<16x128xf32> to vector<16xf32>
      %39 = vector.shape_cast %38 : vector<16xf32> to vector<16x1xf32>
      %cst_24 = arith.constant 3.125000e-02 : f32
      %40 = vector.broadcast %cst_24 : f32 to vector<16x1xf32>
      %41 = arith.mulf %39, %40 : vector<16x1xf32>
      %42 = vector.broadcast %41 : vector<16x1xf32> to vector<16x128xf32>
      %43 = arith.subf %30, %42 : vector<16x128xf32>
      %44 = vector.broadcast %35 : vector<1x128xf32> to vector<16x128xf32>
      %45 = arith.mulf %43, %44 : vector<16x128xf32>
      %46 = arith.mulf %45, %45 : vector<16x128xf32>
      %cst_25 = arith.constant dense<0.000000e+00> : vector<16xf32>
      %47 = vector.multi_reduction <add>, %46, %cst_25 [1] : vector<16x128xf32> to vector<16xf32>
      %48 = vector.shape_cast %47 : vector<16xf32> to vector<16x1xf32>
      %cst_26 = arith.constant 3.125000e-02 : f32
      %49 = vector.broadcast %cst_26 : f32 to vector<16x1xf32>
      %50 = arith.mulf %48, %49 : vector<16x1xf32>
      %cst_27 = arith.constant 9.99999996E-13 : f32
      %51 = vector.broadcast %cst_27 : f32 to vector<16x1xf32>
      %52 = arith.addf %50, %51 : vector<16x1xf32>
      %53 = math.rsqrt %52 : vector<16x1xf32>
      %54 = vector.broadcast %53 : vector<16x1xf32> to vector<16x128xf32>
      %55 = arith.mulf %45, %54 : vector<16x128xf32>
      %c0_28 = arith.constant 0 : index
      %c0_29 = arith.constant 0 : index
      %56 = vector.load %arg7[%c0_28, %c0_29] : memref<1x128xf32, #tpu.memory_space<vmem>>, vector<1x128xf32>
      %57 = vector.broadcast %56 : vector<1x128xf32> to vector<16x128xf32>
      %58 = arith.mulf %55, %57 : vector<16x128xf32>
      %c0_30 = arith.constant 0 : index
      %c0_31 = arith.constant 0 : index
      %59 = vector.load %arg8[%c0_30, %c0_31] : memref<1x128xf32, #tpu.memory_space<vmem>>, vector<1x128xf32>
      %60 = vector.broadcast %59 : vector<1x128xf32> to vector<16x128xf32>
      %61 = arith.addf %58, %60 : vector<16x128xf32>
      %c0_32 = arith.constant 0 : index
      %c0_33 = arith.constant 0 : index
      %62 = vector.load %arg9[%c0_32, %c0_33] : memref<16x128xf32, #tpu.memory_space<vmem>>, vector<16x128xf32>
      tpu.vector_store %arg9[%c0_32, %c0_33], %61 {strides = array<i32>} : memref<16x128xf32, #tpu.memory_space<vmem>>, vector<16x128xf32>,
    } else {
    }
    return
  }
  func.func @transform_0(%arg0: i32, %arg1: i32) -> (i32, i32) {
    %c0_i32 = arith.constant 0 : i32
    %c0_i32_0 = arith.constant 0 : i32
    return %arg0, %c0_i32 : i32, i32
  }
  func.func @transform_1(%arg0: i32, %arg1: i32) -> (i32, i32) {
    %c0_i32 = arith.constant 0 : i32
    %c0_i32_0 = arith.constant 0 : i32
    return %c0_i32, %arg1 : i32, i32
  }
  func.func @transform_2(%arg0: i32, %arg1: i32) -> (i32, i32) {
    %c0_i32 = arith.constant 0 : i32
    %c0_i32_0 = arith.constant 0 : i32
    return %c0_i32, %arg1 : i32, i32
  }
  func.func @transform_3(%arg0: i32, %arg1: i32) -> (i32, i32) {
    %c0_i32 = arith.constant 0 : i32
    %c0_i32_0 = arith.constant 0 : i32
    return %arg1, %c0_i32 : i32, i32
  }
  func.func @transform_4(%arg0: i32, %arg1: i32) -> (i32, i32) {
    %c0_i32 = arith.constant 0 : i32
    %c0_i32_0 = arith.constant 0 : i32
    %c0_i32_1 = arith.constant 0 : i32
    return %c0_i32, %c0_i32_0 : i32, i32
  }
  func.func @transform_5(%arg0: i32, %arg1: i32) -> (i32, i32) {
    %c0_i32 = arith.constant 0 : i32
    %c0_i32_0 = arith.constant 0 : i32
    %c0_i32_1 = arith.constant 0 : i32
    return %c0_i32, %c0_i32_0 : i32, i32
  }
  func.func @transform_6(%arg0: i32, %arg1: i32) -> (i32, i32) {
    %c0_i32 = arith.constant 0 : i32
    %c0_i32_0 = arith.constant 0 : i32
    %c0_i32_1 = arith.constant 0 : i32
    return %c0_i32, %c0_i32_0 : i32, i32
  }
  func.func @transform_7(%arg0: i32, %arg1: i32) -> (i32, i32) {
    %c0_i32 = arith.constant 0 : i32
    %c0_i32_0 = arith.constant 0 : i32
    return %arg0, %c0_i32 : i32, i32
  }
}

</mosaic_0001>

<llo_original>
// kernel: tpu_custom_call.1
$region0: #{tpu_custom_call.1}
  #allocation0 [shape = 'u32[]', space=smem, size = 0x4, offset = 0x4, fixed_abs, tag = 'smem constant byte address 0x4 - core index']
  #allocation1 [shape = 'u32[144,128]{1,0:T(1,128)}', space=vmem, size = 0x12000, scoped, tag = 'internal scratch']
  #allocation2 [shape = 'f32[16,128]{1,0:T(8,128)}', space=vmem, size = 0x2000, scoped, tag = 'scratch operand']
  %s0 = inlined_call_operand.hbm [shape: f32[16,128], index: 0, kind: input, shape index: {}]
  %s1 = inlined_call_operand.hbm [shape: f32[128,128], index: 1, kind: input, shape index: {}]
  %s2 = inlined_call_operand.vmem [shape: f32[1,128], index: 2, kind: input, shape index: {}]
  %s3 = inlined_call_operand.hbm [shape: f32[128,128], index: 3, kind: input, shape index: {}]
  %s4 = inlined_call_operand.vmem [shape: f32[1,128], index: 4, kind: input, shape index: {}]
  %s5 = inlined_call_operand.vmem [shape: f32[1,128], index: 5, kind: input, shape index: {}]
  %s6 = inlined_call_operand.vmem [shape: f32[1,128], index: 6, kind: input, shape index: {}]
  %s7 = inlined_call_operand.hbm [shape: f32[16,128], index: 7, kind: output, shape index: {}]
  %s8 = sld [smem:[#allocation0]]
  $region58: #{tpu_custom_call.1} parent=0
    _
  %s10 = ssub.s32 1, %s8
  %s11 = scalar_select 0, %s10, %s8
  $region1: #{tpu_custom_call.1} parent=0
    #allocation3 [shape = 'u8[8192]{0}', space=vmem, size = 0x2000, scoped, tag = 'input window, operand 0, single buffered']
    #allocation4 [shape = 's32[1]{0}', space=sflag, size = 0x4, scoped, tag = 'scoped memory for tpu_custom_call.1']
    #allocation5 [shape = 's32[1]{0}', space=sflag, size = 0x4, scoped, tag = 'scoped memory for tpu_custom_call.1']
    #allocation6 [shape = 'u8[65536]{0}', space=vmem, size = 0x10000, scoped, tag = 'input window, operand 1, single buffered']
    #allocation7 [shape = 's32[1]{0}', space=sflag, size = 0x4, scoped, tag = 'scoped memory for tpu_custom_call.1']
    #allocation8 [shape = 'u8[65536]{0}', space=vmem, size = 0x10000, scoped, tag = 'input window, operand 3, single buffered']
    #allocation9 [shape = 'u8[8192]{0}', space=vmem, size = 0x2000, scoped, tag = 'output window, operand 0, single buffered']
    %12 = vsyncpa [#allocation4], 0
    %13 = vsyncpa [#allocation7], 0
    %14 = vsyncpa [#allocation5], 0
    // Predicated region
    $region2: #{tpu_custom_call.1} parent=1 // pred_check
      _
    $region3: #{tpu_custom_call.1} parent=1 // pred_check_branch
      %16 = sbr.rel (0) target = $region5
    $region4: #{tpu_custom_call.1} parent=1 // pred_region
      %s18 = ssub.s32 256, 256
      %19 = vsyncadd [#allocation4], %s18
      %s20 = sshll.u32 [#allocation3], 4
      %s21 = int_to_ptr.vmem [resolvable:$true] %s20
      %26 = dma.hbm_to_vmem [thread:$0]  %s0, 256, %s21, [#allocation4], 128, 128, 8
    $region5: #{tpu_custom_call.1} parent=1 // pred_fallthru
      _
    // Predicated region
    $region6: #{tpu_custom_call.1} parent=1 // pred_check
      _
    $region7: #{tpu_custom_call.1} parent=1 // pred_check_branch
      %28 = sbr.rel (0) target = $region9
    $region8: #{tpu_custom_call.1} parent=1 // pred_region
      %s30 = ssub.s32 2048, 2048
      %31 = vsyncadd [#allocation7], %s30
      %s32 = sshll.u32 [#allocation6], 4
      %s33 = int_to_ptr.vmem [resolvable:$true] %s32
      %38 = dma.hbm_to_vmem [thread:$0]  %s1, 2048, %s33, [#allocation7], 128, 128, 8
    $region9: #{tpu_custom_call.1} parent=1 // pred_fallthru
      _
    // Predicated region
    $region10: #{tpu_custom_call.1} parent=1 // pred_check
      _
    $region11: #{tpu_custom_call.1} parent=1 // pred_check_branch
      %40 = sbr.rel (0) target = $region13
    $region12: #{tpu_custom_call.1} parent=1 // pred_region
      _
    $region13: #{tpu_custom_call.1} parent=1 // pred_fallthru
      _
    // Predicated region
    $region14: #{tpu_custom_call.1} parent=1 // pred_check
      _
    $region15: #{tpu_custom_call.1} parent=1 // pred_check_branch
      %42 = sbr.rel (0) target = $region17
    $region16: #{tpu_custom_call.1} parent=1 // pred_region
      %s44 = ssub.s32 2048, 2048
      %45 = vsyncadd [#allocation7], %s44
      %s46 = sshll.u32 [#allocation8], 4
      %s47 = int_to_ptr.vmem [resolvable:$true] %s46
      %52 = dma.hbm_to_vmem [thread:$0]  %s3, 2048, %s47, [#allocation7], 128, 128, 8
    $region17: #{tpu_custom_call.1} parent=1 // pred_fallthru
      _
    // Predicated region
    $region18: #{tpu_custom_call.1} parent=1 // pred_check
      _
    $region19: #{tpu_custom_call.1} parent=1 // pred_check_branch
      %54 = sbr.rel (0) target = $region21
    $region20: #{tpu_custom_call.1} parent=1 // pred_region
      _
    $region21: #{tpu_custom_call.1} parent=1 // pred_fallthru
      _
    // Predicated region
    $region22: #{tpu_custom_call.1} parent=1 // pred_check
      _
    $region23: #{tpu_custom_call.1} parent=1 // pred_check_branch
      %56 = sbr.rel (0) target = $region25
    $region24: #{tpu_custom_call.1} parent=1 // pred_region
      _
    $region25: #{tpu_custom_call.1} parent=1 // pred_fallthru
      _
    // Predicated region
    $region26: #{tpu_custom_call.1} parent=1 // pred_check
      _
    $region27: #{tpu_custom_call.1} parent=1 // pred_check_branch
      %58 = sbr.rel (0) target = $region29
    $region28: #{tpu_custom_call.1} parent=1 // pred_region
      _
    $region29: #{tpu_custom_call.1} parent=1 // pred_fallthru
      _
    // Predicated region
    $region30: #{tpu_custom_call.1} parent=1 // pred_check
      _
    $region31: #{tpu_custom_call.1} parent=1 // pred_check_branch
      %60 = sbr.rel (0) target = $region33
    $region32: #{tpu_custom_call.1} parent=1 // pred_region
      %61 = dma.done [#allocation4], 256
    $region33: #{tpu_custom_call.1} parent=1 // pred_fallthru
      _
    // Predicated region
    $region34: #{tpu_custom_call.1} parent=1 // pred_check
      _
    $region35: #{tpu_custom_call.1} parent=1 // pred_check_branch
      %63 = sbr.rel (0) target = $region37
    $region36: #{tpu_custom_call.1} parent=1 // pred_region
      %64 = dma.done [#allocation7], 2048
    $region37: #{tpu_custom_call.1} parent=1 // pred_fallthru
      _
    // Predicated region
    $region38: #{tpu_custom_call.1} parent=1 // pred_check
      _
    $region39: #{tpu_custom_call.1} parent=1 // pred_check_branch
      %66 = sbr.rel (0) target = $region41
    $region40: #{tpu_custom_call.1} parent=1 // pred_region
      %67 = dma.done [#allocation7], 2048
    $region41: #{tpu_custom_call.1} parent=1 // pred_fallthru
      _
    %p68 = scmp.eq.s32.totalorder 0, 0
    // Predicated region
    $region42: #{tpu_custom_call.1} parent=1 // pred_check
      %p69 = pneg %p68
    $region43: #{tpu_custom_call.1} parent=1 // pred_check_branch
      %71 = sbr.rel (%p69) target = $region45
    $region44: #{tpu_custom_call.1} parent=1 // pred_region
      %72 = vst [vmem:[#allocation2] sm:$0xff] 0.0
      %73 = vst [vmem:[#allocation2 + $0x8] sm:$0xff] 0.0
    $region45: #{tpu_custom_call.1} parent=1 // pred_fallthru
      _
    %v74 = vld [vmem:[#allocation3] sm:$0xff]
    %v75 = vld [vmem:[#allocation3 + $0x8] sm:$0xff]
    %v76 = vld [vmem:[#allocation6] sm:$0xff]
    %v77 = vld [vmem:[#allocation6 + $0x8] sm:$0xff]
    %v78 = vld [vmem:[#allocation6 + $0x10] sm:$0xff]
    %v79 = vld [vmem:[#allocation6 + $0x18] sm:$0xff]
    %v80 = vld [vmem:[#allocation6 + $0x20] sm:$0xff]
    %v81 = vld [vmem:[#allocation6 + $0x28] sm:$0xff]
    %v82 = vld [vmem:[#allocation6 + $0x30] sm:$0xff]
    %v83 = vld [vmem:[#allocation6 + $0x38] sm:$0xff]
    %v84 = vld [vmem:[#allocation6 + $0x40] sm:$0xff]
    %v85 = vld [vmem:[#allocation6 + $0x48] sm:$0xff]
    %v86 = vld [vmem:[#allocation6 + $0x50] sm:$0xff]
    %v87 = vld [vmem:[#allocation6 + $0x58] sm:$0xff]
    %v88 = vld [vmem:[#allocation6 + $0x60] sm:$0xff]
    %v89 = vld [vmem:[#allocation6 + $0x68] sm:$0xff]
    %v90 = vld [vmem:[#allocation6 + $0x70] sm:$0xff]
    %v91 = vld [vmem:[#allocation6 + $0x78] sm:$0xff]
    %v92 = vld [vmem:[%s2] sm:$0x1]
    %v94 = vlaneseq
    %v95 = vshrl.u32 %v94, 7
    %v96 = vsub.s32 0, %v95
    %v97 = vrot.slane %v92, %v96
    %99 = vmatprep.subr.mxu0 0.0
    %100 = vmatpush1.msra.mxu0 %v91
    %101 = vmatprep.subr.mxu0 0.0
    %102 = vmatpush1.msra.mxu0 %v90
    %103 = vmatprep.subr.mxu0 0.0
    %104 = vmatpush1.msra.mxu0 %v89
    %105 = vmatprep.subr.mxu0 0.0
    %106 = vmatpush1.msra.mxu0 %v88
    %107 = vmatprep.subr.mxu0 0.0
    %108 = vmatpush1.msra.mxu0 %v87
    %109 = vmatprep.subr.mxu0 0.0
    %110 = vmatpush1.msra.mxu0 %v86
    %111 = vmatprep.subr.mxu0 0.0
    %112 = vmatpush1.msra.mxu0 %v85
    %113 = vmatprep.subr.mxu0 0.0
    %114 = vmatpush1.msra.mxu0 %v84
    %115 = vmatprep.subr.mxu0 0.0
    %116 = vmatpush1.msra.mxu0 %v83
    %117 = vmatprep.subr.mxu0 0.0
    %118 = vmatpush1.msra.mxu0 %v82
    %119 = vmatprep.subr.mxu0 0.0
    %120 = vmatpush1.msra.mxu0 %v81
    %121 = vmatprep.subr.mxu0 0.0
    %122 = vmatpush1.msra.mxu0 %v80
    %123 = vmatprep.subr.mxu0 0.0
    %124 = vmatpush1.msra.mxu0 %v79
    %125 = vmatprep.subr.mxu0 0.0
    %126 = vmatpush1.msra.mxu0 %v78
    %127 = vmatprep.subr.mxu0 0.0
    %128 = vmatpush1.msra.mxu0 %v77
    %129 = vmatprep.subr.mxu0 0.0
    %130 = vmatpush1.msra.mxu0 %v76
    %131 = vmatprep.subr.mxu0 0.0
    %132 = vmatpush2.msra.mxu0 0.0
    %133 = vmatprep.subr.mxu0 0.0
    %134 = vmatpush2.msra.mxu0 0.0
    %135 = vmatprep.subr.mxu0 0.0
    %136 = vmatpush2.msra.mxu0 0.0
    %137 = vmatprep.subr.mxu0 0.0
    %138 = vmatpush2.msra.mxu0 0.0
    %139 = vmatprep.subr.mxu0 0.0
    %140 = vmatpush2.msra.mxu0 0.0
    %141 = vmatprep.subr.mxu0 0.0
    %142 = vmatpush2.msra.mxu0 0.0
    %143 = vmatprep.subr.mxu0 0.0
    %144 = vmatpush2.msra.mxu0 0.0
    %145 = vmatprep.subr.mxu0 0.0
    %146 = vmatpush2.msra.mxu0 0.0
    %147 = vmatprep.subr.mxu0 0.0
    %148 = vmatpush2.msra.mxu0 0.0
    %149 = vmatprep.subr.mxu0 0.0
    %150 = vmatpush2.msra.mxu0 0.0
    %151 = vmatprep.subr.mxu0 0.0
    %152 = vmatpush2.msra.mxu0 0.0
    %153 = vmatprep.subr.mxu0 0.0
    %154 = vmatpush2.msra.mxu0 0.0
    %155 = vmatprep.subr.mxu0 0.0
    %156 = vmatpush2.msra.mxu0 0.0
    %157 = vmatprep.subr.mxu0 0.0
    %158 = vmatpush2.msra.mxu0 0.0
    %159 = vmatprep.subr.mxu0 0.0
    %160 = vmatpush2.msra.mxu0 0.0
    %161 = vmatprep.subr.mxu0 0.0
    %162 = vmatpush2.msra.mxu0 0.0
    %163 = vmatprep.mubr.f32.mxu0 0.0
    %164 = vmatmul.mubr.f32.gmra.mxu0 %v74
    %v165 = vpop.f32.mrf.mxu0
    %v166 = vadd.f32 %v97, %v165
    %v167 = vpop.f32.mrf.mxu0
    %168 = vmatprep.mubr.f32.mxu0 0.0
    %169 = vmatmul.mubr.f32.gmra.mxu0 %v75
    %v170 = vpop.f32.mrf.mxu0
    %v171 = vadd.f32 %v97, %v170
    %v172 = vpop.f32.mrf.mxu0
    %173 = vdwg.mxu0
    %v174 = vadd.f32 %v166, 3.0
    %v175 = vadd.f32 %v171, 3.0
    %v176 = vmax.f32 %v174, 0.0
    %v177 = vmax.f32 %v175, 0.0
    %v178 = vmin.f32 %v176, 6.0
    %v179 = vmin.f32 %v177, 6.0
    %v180 = vmul.f32 %v166, %v178
    %v181 = vmul.f32 %v171, %v179
    %v182 = vmul.f32 %v180, 0.16666667
    %v183 = vmul.f32 %v181, 0.16666667
    %v184 = vld [vmem:[#allocation2] sm:$0xff]
    %v185 = vld [vmem:[#allocation2 + $0x8] sm:$0xff]
    %v186 = vld [vmem:[#allocation8] sm:$0xff]
    %v187 = vld [vmem:[#allocation8 + $0x8] sm:$0xff]
    %v188 = vld [vmem:[#allocation8 + $0x10] sm:$0xff]
    %v189 = vld [vmem:[#allocation8 + $0x18] sm:$0xff]
    %v190 = vld [vmem:[#allocation8 + $0x20] sm:$0xff]
    %v191 = vld [vmem:[#allocation8 + $0x28] sm:$0xff]
    %v192 = vld [vmem:[#allocation8 + $0x30] sm:$0xff]
    %v193 = vld [vmem:[#allocation8 + $0x38] sm:$0xff]
    %v194 = vld [vmem:[#allocation8 + $0x40] sm:$0xff]
    %v195 = vld [vmem:[#allocation8 + $0x48] sm:$0xff]
    %v196 = vld [vmem:[#allocation8 + $0x50] sm:$0xff]
    %v197 = vld [vmem:[#allocation8 + $0x58] sm:$0xff]
    %v198 = vld [vmem:[#allocation8 + $0x60] sm:$0xff]
    %v199 = vld [vmem:[#allocation8 + $0x68] sm:$0xff]
    %v200 = vld [vmem:[#allocation8 + $0x70] sm:$0xff]
    %v201 = vld [vmem:[#allocation8 + $0x78] sm:$0xff]
    %202 = vmatprep.subr.mxu0 0.0
    %203 = vmatpush1.msra.mxu0 %v201
    %204 = vmatprep.subr.mxu0 0.0
    %205 = vmatpush1.msra.mxu0 %v200
    %206 = vmatprep.subr.mxu0 0.0
    %207 = vmatpush1.msra.mxu0 %v199
    %208 = vmatprep.subr.mxu0 0.0
    %209 = vmatpush1.msra.mxu0 %v198
    %210 = vmatprep.subr.mxu0 0.0
    %211 = vmatpush1.msra.mxu0 %v197
    %212 = vmatprep.subr.mxu0 0.0
    %213 = vmatpush1.msra.mxu0 %v196
    %214 = vmatprep.subr.mxu0 0.0
    %215 = vmatpush1.msra.mxu0 %v195
    %216 = vmatprep.subr.mxu0 0.0
    %217 = vmatpush1.msra.mxu0 %v194
    %218 = vmatprep.subr.mxu0 0.0
    %219 = vmatpush1.msra.mxu0 %v193
    %220 = vmatprep.subr.mxu0 0.0
    %221 = vmatpush1.msra.mxu0 %v192
    %222 = vmatprep.subr.mxu0 0.0
    %223 = vmatpush1.msra.mxu0 %v191
    %224 = vmatprep.subr.mxu0 0.0
    %225 = vmatpush1.msra.mxu0 %v190
    %226 = vmatprep.subr.mxu0 0.0
    %227 = vmatpush1.msra.mxu0 %v189
    %228 = vmatprep.subr.mxu0 0.0
    %229 = vmatpush1.msra.mxu0 %v188
    %230 = vmatprep.subr.mxu0 0.0
    %231 = vmatpush1.msra.mxu0 %v187
    %232 = vmatprep.subr.mxu0 0.0
    %233 = vmatpush1.msra.mxu0 %v186
    %234 = vmatprep.subr.mxu0 0.0
    %235 = vmatpush2.msra.mxu0 0.0
    %236 = vmatprep.subr.mxu0 0.0
    %237 = vmatpush2.msra.mxu0 0.0
    %238 = vmatprep.subr.mxu0 0.0
    %239 = vmatpush2.msra.mxu0 0.0
    %240 = vmatprep.subr.mxu0 0.0
    %241 = vmatpush2.msra.mxu0 0.0
    %242 = vmatprep.subr.mxu0 0.0
    %243 = vmatpush2.msra.mxu0 0.0
    %244 = vmatprep.subr.mxu0 0.0
    %245 = vmatpush2.msra.mxu0 0.0
    %246 = vmatprep.subr.mxu0 0.0
    %247 = vmatpush2.msra.mxu0 0.0
    %248 = vmatprep.subr.mxu0 0.0
    %249 = vmatpush2.msra.mxu0 0.0
    %250 = vmatprep.subr.mxu0 0.0
    %251 = vmatpush2.msra.mxu0 0.0
    %252 = vmatprep.subr.mxu0 0.0
    %253 = vmatpush2.msra.mxu0 0.0
    %254 = vmatprep.subr.mxu0 0.0
    %255 = vmatpush2.msra.mxu0 0.0
    %256 = vmatprep.subr.mxu0 0.0
    %257 = vmatpush2.msra.mxu0 0.0
    %258 = vmatprep.subr.mxu0 0.0
    %259 = vmatpush2.msra.mxu0 0.0
    %260 = vmatprep.subr.mxu0 0.0
    %261 = vmatpush2.msra.mxu0 0.0
    %262 = vmatprep.subr.mxu0 0.0
    %263 = vmatpush2.msra.mxu0 0.0
    %264 = vmatprep.subr.mxu0 0.0
    %265 = vmatpush2.msra.mxu0 0.0
    %266 = vmatprep.mubr.f32.mxu0 0.0
    %267 = vmatmul.mubr.f32.gmra.mxu0 %v182
    %v268 = vpop.f32.mrf.mxu0
    %v269 = vadd.f32 0.0, %v268
    %v270 = vpop.f32.mrf.mxu0
    %271 = vmatprep.mubr.f32.mxu0 0.0
    %272 = vmatmul.mubr.f32.gmra.mxu0 %v183
    %v273 = vpop.f32.mrf.mxu0
    %v274 = vadd.f32 0.0, %v273
    %v275 = vpop.f32.mrf.mxu0
    %276 = vdwg.mxu0
    %v277 = vadd.f32 %v184, %v269
    %v278 = vadd.f32 %v185, %v274
    %279 = vst [vmem:[#allocation2] sm:$0xff] %v277
    %280 = vst [vmem:[#allocation2 + $0x8] sm:$0xff] %v278
    // Predicated region
    $region46: #{tpu_custom_call.1} parent=1 // pred_check
      %p281 = pneg %p68
    $region47: #{tpu_custom_call.1} parent=1 // pred_check_branch
      %283 = sbr.rel (%p281) target = $region49
    $region48: #{tpu_custom_call.1} parent=1 // pred_region
      %v284 = vld [vmem:[#allocation2] sm:$0xff]
      %v285 = vld [vmem:[#allocation2 + $0x8] sm:$0xff]
      %v286 = vld [vmem:[%s4] sm:$0x1]
      %v288 = vlaneseq
      %v289 = vshrl.u32 %v288, 7
      %v290 = vsub.s32 0, %v289
      %v291 = vrot.slane %v286, %v290
      %v293 = vadd.f32 %v284, %v291
      %v294 = vadd.f32 %v285, %v291
      %v295 = vadd.f32 %v293, %v74
      %v296 = vadd.f32 %v294, %v75
      %v297 = vlaneseq
      %v298 = vand.u32 %v297, 127
      %vm299 = vcmp.lt.s32.totalorder %v298, 32
      %v300 = vsel %vm299, 1, 0
      %v301 = vcvt.s32.f32 %v300
      %v302 = vmul.f32 %v295, %v301
      %v303 = vmul.f32 %v296, %v301
      %304 = vadd.xlane.f32.xlu0 %v302
      %v305 = vpop.xlane.xlu0 %304
      %306 = vadd.xlane.f32.xlu0 %v303
      %v307 = vpop.xlane.xlu0 %306
      %v308 = vmul.f32 %v305, 0.03125
      %v309 = vmul.f32 %v307, 0.03125
      %v310 = vsub.f32 %v295, %v308
      %v311 = vsub.f32 %v296, %v309
      %v312 = vmul.f32 %v310, %v301
      %v313 = vmul.f32 %v311, %v301
      %v314 = vmul.f32 %v312, %v312
      %v315 = vmul.f32 %v313, %v313
      %316 = vadd.xlane.f32.xlu0 %v314
      %v317 = vpop.xlane.xlu0 %316
      %318 = vadd.xlane.f32.xlu0 %v315
      %v319 = vpop.xlane.xlu0 %318
      %v320 = vmul.f32 %v317, 0.03125
      %v321 = vmul.f32 %v319, 0.03125
      %v322 = vadd.f32 %v320, 1e-12
      %v323 = vadd.f32 %v321, 1e-12
      %v324 = vrsqrt.pop %v322
      %v325 = vrsqrt.pop %v323
      %v326 = vmul.f32 %v312, %v324
      %v327 = vmul.f32 %v313, %v325
      %v328 = vld [vmem:[%s5] sm:$0x1]
      %v330 = vlaneseq
      %v331 = vshrl.u32 %v330, 7
      %v332 = vsub.s32 0, %v331
      %v333 = vrot.slane %v328, %v332
      %v335 = vmul.f32 %v326, %v333
      %v336 = vmul.f32 %v327, %v333
      %v337 = vld [vmem:[%s6] sm:$0x1]
      %v339 = vlaneseq
      %v340 = vshrl.u32 %v339, 7
      %v341 = vsub.s32 0, %v340
      %v342 = vrot.slane %v337, %v341
      %v344 = vadd.f32 %v335, %v342
      %v345 = vadd.f32 %v336, %v342
      %346 = vst [vmem:[#allocation9] sm:$0xff] %v344
      %347 = vst [vmem:[#allocation9 + $0x8] sm:$0xff] %v345
    $region49: #{tpu_custom_call.1} parent=1 // pred_fallthru
      _
    // Predicated region
    $region50: #{tpu_custom_call.1} parent=1 // pred_check
      _
    $region51: #{tpu_custom_call.1} parent=1 // pred_check_branch
      %349 = sbr.rel (0) target = $region53
    $region52: #{tpu_custom_call.1} parent=1 // pred_region
      %s351 = ssub.s32 256, 256
      %352 = vsyncadd [#allocation5], %s351
      %s353 = sshll.u32 [#allocation9], 4
      %s354 = int_to_ptr.vmem [resolvable:$true] %s353
      %359 = dma.vmem_to_hbm [thread:$0]  %s354, 256, %s7, [#allocation5], 128, 128, 8
    $region53: #{tpu_custom_call.1} parent=1 // pred_fallthru
      _
    // Predicated region
    $region54: #{tpu_custom_call.1} parent=1 // pred_check
      _
    $region55: #{tpu_custom_call.1} parent=1 // pred_check_branch
      %361 = sbr.rel (0) target = $region57
    $region56: #{tpu_custom_call.1} parent=1 // pred_region
      %362 = dma.done [#allocation5], 256
    $region57: #{tpu_custom_call.1} parent=1 // pred_fallthru
      _
    %363 = vsyncpa [#allocation4], 1
    %364 = vsyncpa [#allocation7], 1
    %365 = vsyncpa [#allocation5], 1

</llo_original>
